<compile_context>
chip_gen: v6e
topology: v6e:2x2x1
jax: 0.10.0
libtpu: 0.0.40
codegen_flags: <defaults>
</compile_context>

<pallas_src>
import functools

import numpy as np
import jax
import jax.numpy as jnp
from jax import lax
from jax.experimental import pallas as pl
from jax.experimental.pallas import tpu as pltpu


def _cdiv(a, b):
    return -(-a // b)


def _round_up(a, b):
    return -(-a // b) * b


def _ldam_nll_kernel(x_ref, t_ref, sm_ref, o_ref, *, s):
    # x: (TILE_B, C) f32/bf16, classes on lanes.  t: (TILE_B, 1) i32.  sm: (1, C) f32
    # holding s * m_list.  Output: per-sample NLL, (TILE_B, 1) f32.
    x = x_ref[...].astype(jnp.float32)
    col = lax.broadcasted_iota(jnp.int32, x.shape, 1)
    mask = col == t_ref[...]                                   # target one-hot (bool)
    z = s * x - jnp.where(mask, sm_ref[...], 0.0)              # s*(x - m*onehot), VPU
    zmax = jnp.max(z, axis=1, keepdims=True)                   # XLU reduction 1
    sumexp = jnp.sum(jnp.exp(z - zmax), axis=1, keepdims=True)  # 2 (exp on EUP)
    z_tgt = jnp.sum(jnp.where(mask, z, 0.0), axis=1, keepdims=True)  # 3: z[target]
    # Precondition: 0 <= target < C (out-of-range targets give z_tgt = 0, silently
    # wrong, matching the ill-defined reference).
    o_ref[...] = zmax + jnp.log(sumexp) - z_tgt


def _pick_batch_tile(B, C, itemsize, row_align):
    """Batch tile rows, grid steps and scoped-VMEM limit (generation aware)."""
    phys = 64 * 1024 * 1024                      # conservative fallback (v7x size)
    try:
        phys = int(pltpu.get_tpu_info().vmem_capacity_bytes)
    except Exception:
        pass
    vmem_limit = min(64 * 1024 * 1024, max(phys // 2, 16 * 1024 * 1024))
    tile_cap_bytes = min(8 * 1024 * 1024, vmem_limit // 5)     # 2x bufs + block temps
    tile_cap_rows = (tile_cap_bytes // (C * itemsize)) // row_align * row_align
    if tile_cap_rows < row_align:
        # Huge class count: minimum row tile, widen the scoped limit so the
        # double-buffered (row_align, C) tiles plus block temporaries still fit.
        # TODO(synk): chunk the class axis with an online-softmax (running max /
        # running sum-exp) second grid dimension once even this no longer fits.
        tile_cap_rows = row_align
        needed = 6 * row_align * C * itemsize
        vmem_limit = max(vmem_limit, min(needed, phys * 3 // 4))

    n = max(1, _cdiv(B, tile_cap_rows))
    # Balance the "parallel" batch grid across v7x's 2 TensorCores: even step count,
    # and at least 2 (4 for larger B) steps when B allows it. Harmless on v5e/v6e.
    if B >= 8 * row_align:
        n = max(n, 4)
    elif B >= 2 * row_align:
        n = max(n, 2)
    if n > 1 and n % 2:
        n += 1
    tile_b = min(B, _round_up(_cdiv(B, n), row_align))
    n = _cdiv(B, tile_b)
    return tile_b, n, vmem_limit


def ldam_loss_pallas(x, target, m_list, s=30.0):
    B, C = x.shape
    if x.dtype not in (jnp.float32, jnp.bfloat16):
        x = x.astype(jnp.float32)                  # keep f32/bf16 as-is: no HBM upcast
    target2d = target.astype(jnp.int32).reshape(B, 1)          # free (bitcast) reshape
    sm = (float(s) * m_list.astype(jnp.float32)).reshape(1, C)  # fold s into m

    row_align = 16 if x.dtype == jnp.bfloat16 else 8
    tile_b, n_steps, vmem_limit = _pick_batch_tile(B, C, x.dtype.itemsize, row_align)

    # TODO(synk): per-class `weight` of F.cross_entropy is None in this config;
    # per-class weighting is not implemented.
    # TODO(synk): for C < 128 the lane axis is under-filled (C of 128 lanes); a
    # roll-based segmented reduce over a (B*C//128, 128) view would restore lane
    # density for very large-B / tiny-C workloads.
    nll = pl.pallas_call(
        functools.partial(_ldam_nll_kernel, s=float(s)),
        out_shape=jax.ShapeDtypeStruct((B, 1), jnp.float32),
        grid=(n_steps,),
        in_specs=[
            pl.BlockSpec((tile_b, C), lambda i: (i, 0)),   # x tile, class axis whole
            pl.BlockSpec((tile_b, 1), lambda i: (i, 0)),   # targets
            pl.BlockSpec((1, C), lambda i: (0, 0)),        # s*m_list resident
        ],
        out_specs=pl.BlockSpec((tile_b, 1), lambda i: (i, 0)),
        compiler_params=pltpu.CompilerParams(
            dimension_semantics=("parallel",),
            vmem_limit_bytes=int(vmem_limit)),
    )(x, target2d, sm)

    return jnp.mean(nll[:, 0])


def ldam_loss_ref(x, target, m_list, s=30.0):
    # Pure-JAX reference of the canonical (one-hot) LDAM forward, in f32.
    x = x.astype(jnp.float32)
    onehot = jax.nn.one_hot(target, x.shape[1], dtype=x.dtype)
    batch_m = (m_list.astype(x.dtype)[None, :] @ onehot.T).reshape(-1, 1)
    output = jnp.where(onehot > 0, x - batch_m, x)
    logp = jax.nn.log_softmax(s * output, axis=-1)
    return -jnp.mean(jnp.take_along_axis(logp, target[:, None], axis=1))


def make_m_list(cls_num_list, max_m=0.5):
    m = 1.0 / np.sqrt(np.sqrt(np.asarray(cls_num_list, dtype=np.float64)))
    m = m * (max_m / np.max(m))
    return jnp.asarray(m, dtype=jnp.float32)


if __name__ == "__main__":
    key = jax.random.PRNGKey(0)
    kx1, kt1, kx2, kt2, kx3, kt3 = jax.random.split(key, 6)

    # Case 1: small class count (C=16 < 128), f32.
    B1, C1 = 32, 16
    m1 = make_m_list([100 - 5 * i for i in range(C1)], max_m=0.5)
    x1 = jax.random.normal(kx1, (B1, C1), dtype=jnp.float32)
    t1 = jax.random.randint(kt1, (B1,), 0, C1, dtype=jnp.int32)
    loss1 = ldam_loss_pallas(x1, t1, m1, s=30.0)
    jax.block_until_ready(loss1)
    ref1 = ldam_loss_ref(x1, t1, m1, s=30.0)
    assert np.allclose(np.asarray(loss1), np.asarray(ref1), rtol=5e-5, atol=5e-4), (
        float(loss1), float(ref1))

    # Case 2: C >= 128, not a multiple of 128, multi-step ragged-tail batch grid.
    B2, C2 = 1040, 160
    m2 = make_m_list([200 - i for i in range(C2)], max_m=0.5)
    x2 = jax.random.normal(kx2, (B2, C2), dtype=jnp.float32)
    t2 = jax.random.randint(kt2, (B2,), 0, C2, dtype=jnp.int32)
    loss2 = ldam_loss_pallas(x2, t2, m2, s=30.0)
    jax.block_until_ready(loss2)
    ref2 = ldam_loss_ref(x2, t2, m2, s=30.0)
    assert np.allclose(np.asarray(loss2), np.asarray(ref2), rtol=5e-5, atol=5e-4), (
        float(loss2), float(ref2))

    # Case 3: bf16 activations streamed as bf16 (cast to f32 in-kernel), partial tail.
    B3, C3 = 70, 128
    m3 = make_m_list([150 - i for i in range(C3)], max_m=0.5)
    x3 = jax.random.normal(kx3, (B3, C3), dtype=jnp.float32).astype(jnp.bfloat16)
    t3 = jax.random.randint(kt3, (B3,), 0, C3, dtype=jnp.int32)
    loss3 = ldam_loss_pallas(x3, t3, m3, s=30.0)
    jax.block_until_ready(loss3)
    ref3 = ldam_loss_ref(x3, t3, m3, s=30.0)
    assert np.allclose(np.asarray(loss3), np.asarray(ref3), rtol=5e-5, atol=1e-3), (
        float(loss3), float(ref3))

    print("KERNEL_OK")
</pallas_src>

<mosaic_0001>
module attributes {stable_mosaic.version = 11 : i64} {
  func.func @_ldam_nll_kernel(%arg0: i32, %arg1: memref<16x16xf32, #tpu.memory_space<vmem>>, %arg2: memref<16x1xi32, #tpu.memory_space<vmem>>, %arg3: memref<1x16xf32, #tpu.memory_space<vmem>>, %arg4: memref<16x1xf32, #tpu.memory_space<vmem>>) attributes {dimension_semantics = [#tpu.dimension_semantics<parallel>], iteration_bounds = array<i64: 2>, scalar_prefetch = 0 : i64, scratch_operands = 0 : i64, tpu.core_type = #tpu.core_type<tc>, window_params = [{transform_indices = @transform_0, window_bounds = array<i64: 16, 16>}, {transform_indices = @transform_1, window_bounds = array<i64: 16, 1>}, {pipeline_mode = #tpu.pipeline_mode<synchronous>, transform_indices = @transform_2, window_bounds = array<i64: 1, 16>}, {transform_indices = @transform_3, window_bounds = array<i64: 16, 1>}]} {
    %c0 = arith.constant 0 : index
    %c0_0 = arith.constant 0 : index
    %0 = vector.load %arg1[%c0, %c0_0] : memref<16x16xf32, #tpu.memory_space<vmem>>, vector<16x16xf32>
    %1 = tpu.iota {dimensions = array<i32: 1>} : vector<16x16xi32>
    %c0_1 = arith.constant 0 : index
    %c0_2 = arith.constant 0 : index
    %2 = vector.load %arg2[%c0_1, %c0_2] : memref<16x1xi32, #tpu.memory_space<vmem>>, vector<16x1xi32>
    %3 = vector.broadcast %2 : vector<16x1xi32> to vector<16x16xi32>
    %4 = arith.cmpi eq, %1, %3 : vector<16x16xi32>
    %cst = arith.constant 3.000000e+01 : f32
    %5 = vector.broadcast %cst : f32 to vector<16x16xf32>
    %6 = arith.mulf %5, %0 : vector<16x16xf32>
    %c0_3 = arith.constant 0 : index
    %c0_4 = arith.constant 0 : index
    %7 = vector.load %arg3[%c0_3, %c0_4] : memref<1x16xf32, #tpu.memory_space<vmem>>, vector<1x16xf32>
    %cst_5 = arith.constant 0.000000e+00 : f32
    %8 = vector.shape_cast %7 : vector<1x16xf32> to vector<1x16xf32>
    %9 = vector.broadcast %8 : vector<1x16xf32> to vector<16x16xf32>
    %10 = vector.broadcast %cst_5 : f32 to vector<16x16xf32>
    %11 = arith.select %4, %9, %10 : vector<16x16xi1>, vector<16x16xf32>
    %12 = arith.subf %6, %11 : vector<16x16xf32>
    %cst_6 = arith.constant dense<0xFF800000> : vector<16xf32>
    %13 = vector.multi_reduction <maximumf>, %12, %cst_6 [1] : vector<16x16xf32> to vector<16xf32>
    %14 = vector.shape_cast %13 : vector<16xf32> to vector<16x1xf32>
    %15 = vector.broadcast %14 : vector<16x1xf32> to vector<16x16xf32>
    %16 = arith.subf %12, %15 : vector<16x16xf32>
    %17 = math.exp %16 : vector<16x16xf32>
    %cst_7 = arith.constant dense<0.000000e+00> : vector<16xf32>
    %18 = vector.multi_reduction <add>, %17, %cst_7 [1] : vector<16x16xf32> to vector<16xf32>
    %19 = vector.shape_cast %18 : vector<16xf32> to vector<16x1xf32>
    %cst_8 = arith.constant 0.000000e+00 : f32
    %20 = vector.broadcast %cst_8 : f32 to vector<16x16xf32>
    %21 = arith.select %4, %12, %20 : vector<16x16xi1>, vector<16x16xf32>
    %cst_9 = arith.constant dense<0.000000e+00> : vector<16xf32>
    %22 = vector.multi_reduction <add>, %21, %cst_9 [1] : vector<16x16xf32> to vector<16xf32>
    %23 = vector.shape_cast %22 : vector<16xf32> to vector<16x1xf32>
    %24 = math.log %19 : vector<16x1xf32>
    %25 = arith.addf %14, %24 : vector<16x1xf32>
    %26 = arith.subf %25, %23 : vector<16x1xf32>
    %c0_10 = arith.constant 0 : index
    %c0_11 = arith.constant 0 : index
    %27 = vector.load %arg4[%c0_10, %c0_11] : memref<16x1xf32, #tpu.memory_space<vmem>>, vector<16x1xf32>
    tpu.vector_store %arg4[%c0_10, %c0_11], %26 {strides = array<i32>} : memref<16x1xf32, #tpu.memory_space<vmem>>, vector<16x1xf32>,
    return
  }
  func.func @transform_0(%arg0: i32) -> (i32, i32) {
    %c0_i32 = arith.constant 0 : i32
    %c0_i32_0 = arith.constant 0 : i32
    return %arg0, %c0_i32 : i32, i32
  }
  func.func @transform_1(%arg0: i32) -> (i32, i32) {
    %c0_i32 = arith.constant 0 : i32
    %c0_i32_0 = arith.constant 0 : i32
    return %arg0, %c0_i32 : i32, i32
  }
  func.func @transform_2(%arg0: i32) -> (i32, i32) {
    %c0_i32 = arith.constant 0 : i32
    %c0_i32_0 = arith.constant 0 : i32
    %c0_i32_1 = arith.constant 0 : i32
    return %c0_i32, %c0_i32_0 : i32, i32
  }
  func.func @transform_3(%arg0: i32) -> (i32, i32) {
    %c0_i32 = arith.constant 0 : i32
    %c0_i32_0 = arith.constant 0 : i32
    return %arg0, %c0_i32 : i32, i32
  }
}

</mosaic_0001>

<llo_original>
// kernel: tpu_custom_call.1
$region0: #{tpu_custom_call.1}
  #allocation0 [shape = 'u32[]', space=smem, size = 0x4, offset = 0x4, fixed_abs, tag = 'smem constant byte address 0x4 - core index']
  #allocation1 [shape = 'u32[144,128]{1,0:T(1,128)}', space=vmem, size = 0x12000, scoped, tag = 'internal scratch']
  %s0 = inlined_call_operand.vmem [shape: f32[32,16], index: 0, kind: input, shape index: {}]
  %s1 = inlined_call_operand.vmem [shape: s32[32,1], index: 1, kind: input, shape index: {}]
  %s2 = inlined_call_operand.vmem [shape: f32[1,16], index: 2, kind: input, shape index: {}]
  %s3 = inlined_call_operand.vmem [shape: f32[32,1], index: 3, kind: output, shape index: {}]
  %s4 = sld [smem:[#allocation0]]
  $region45: #{tpu_custom_call.1} parent=0
    _
  %s6 = ssub.s32 1, %s4
  %s7 = scalar_select 0, %s6, %s4
  loop: start=0, step=1, limit=4
  $region2: #{tpu_custom_call.1} parent=0 // loop_pre_header
    _
  $region3: #{tpu_custom_call.1} parent=0 // loop_header
    %s9 = sphi 0, %s13
    %p10 = scmp.ge.s32.totalorder %s9, 4
    %s19 = sphi 0, %s21
    %s22 = sphi 0, %s19
    %s23 = sphi 0, %s22
    %s39 = sphi 0, %s23
    %s45 = sphi 0, %s47
    %s48 = sphi 0, %s45
    %s49 = sphi 0, %s48
    %s65 = sphi 0, %s49
    %s69 = sphi 0, %s69
    %s71 = sphi 0, %s69
    %s72 = sphi 0, %s71
    %s86 = sphi 0, %s72
    %s92 = sphi 0, %s94
    %s95 = sphi 0, %s92
    %s96 = sphi 0, %s95
    %s112 = sphi 0, %s96
  $region4: #{tpu_custom_call.1} parent=0 // loop_header_branch
    %12 = sbr.rel (%p10) target = $region8
  $region5: #{tpu_custom_call.1} parent=0 // loop_body
    %s14 = ssub.s32 %s9, 1
    %s15 = ssub.s32 %s9, 2
    %s16 = sadd.s32 %s9, 1
    %s17 = ssub.s32 %s9, %s16
    %p18 = scmp.eq.s32.totalorder %s17, 0
    %s20 = sadd.s32 %s19, 1
    %s21 = scalar_select %p18, %s19, %s20
    %p24 = pneg %p18
    %p25 = scmp.eq.s32.totalorder %s9, 1
    %p26 = por %p24, %p25
    %p27 = scmp.ne.s32.totalorder %s19, %s22
    %p28 = scmp.eq.s32.totalorder %s9, 0
    %p29 = por %p27, %p28
    %p30 = scmp.ne.s32.totalorder %s19, %s22
    %p31 = scmp.eq.s32.totalorder %s14, 1
    %p32 = por %p30, %p31
    %p33 = scmp.ne.s32.totalorder %s22, %s23
    %p34 = scmp.eq.s32.totalorder %s14, 0
    %p35 = por %p33, %p34
    %p36 = scmp.ne.s32.totalorder %s22, %s23
    %p37 = scmp.eq.s32.totalorder %s15, 1
    %p38 = por %p36, %p37
    %p40 = scmp.ne.s32.totalorder %s23, %s39
    %p41 = scmp.eq.s32.totalorder %s15, 0
    %p42 = por %p40, %p41
    %s43 = ssub.s32 %s9, %s16
    %p44 = scmp.eq.s32.totalorder %s43, 0
    %s46 = sadd.s32 %s45, 1
    %s47 = scalar_select %p44, %s45, %s46
    %p50 = pneg %p44
    %p51 = scmp.eq.s32.totalorder %s9, 1
    %p52 = por %p50, %p51
    %p53 = scmp.ne.s32.totalorder %s45, %s48
    %p54 = scmp.eq.s32.totalorder %s9, 0
    %p55 = por %p53, %p54
    %p56 = scmp.ne.s32.totalorder %s45, %s48
    %p57 = scmp.eq.s32.totalorder %s14, 1
    %p58 = por %p56, %p57
    %p59 = scmp.ne.s32.totalorder %s48, %s49
    %p60 = scmp.eq.s32.totalorder %s14, 0
    %p61 = por %p59, %p60
    %p62 = scmp.ne.s32.totalorder %s48, %s49
    %p63 = scmp.eq.s32.totalorder %s15, 1
    %p64 = por %p62, %p63
    %p66 = scmp.ne.s32.totalorder %s49, %s65
    %p67 = scmp.eq.s32.totalorder %s15, 0
    %p68 = por %p66, %p67
    %s70 = sadd.s32 %s69, 1
    %p73 = scmp.eq.s32.totalorder %s9, 1
    %p74 = scmp.ne.s32.totalorder %s69, %s71
    %p75 = scmp.eq.s32.totalorder %s9, 0
    %p76 = por %p74, %p75
    %p77 = scmp.ne.s32.totalorder %s69, %s71
    %p78 = scmp.eq.s32.totalorder %s14, 1
    %p79 = por %p77, %p78
    %p80 = scmp.ne.s32.totalorder %s71, %s72
    %p81 = scmp.eq.s32.totalorder %s14, 0
    %p82 = por %p80, %p81
    %p83 = scmp.ne.s32.totalorder %s71, %s72
    %p84 = scmp.eq.s32.totalorder %s15, 1
    %p85 = por %p83, %p84
    %p87 = scmp.ne.s32.totalorder %s72, %s86
    %p88 = scmp.eq.s32.totalorder %s15, 0
    %p89 = por %p87, %p88
    %s90 = ssub.s32 %s9, %s16
    %p91 = scmp.eq.s32.totalorder %s90, 0
    %s93 = sadd.s32 %s92, 1
    %s94 = scalar_select %p91, %s92, %s93
    %p97 = pneg %p91
    %p98 = scmp.eq.s32.totalorder %s9, 1
    %p99 = por %p97, %p98
    %p100 = scmp.ne.s32.totalorder %s92, %s95
    %p101 = scmp.eq.s32.totalorder %s9, 0
    %p102 = por %p100, %p101
    %p103 = scmp.ne.s32.totalorder %s92, %s95
    %p104 = scmp.eq.s32.totalorder %s14, 1
    %p105 = por %p103, %p104
    %p106 = scmp.ne.s32.totalorder %s95, %s96
    %p107 = scmp.eq.s32.totalorder %s14, 0
    %p108 = por %p106, %p107
    %p109 = scmp.ne.s32.totalorder %s95, %s96
    %p110 = scmp.eq.s32.totalorder %s15, 1
    %p111 = por %p109, %p110
    %p113 = scmp.ne.s32.totalorder %s96, %s112
    %p114 = scmp.eq.s32.totalorder %s15, 0
    %p115 = por %p113, %p114
    %p116 = scmp.le.s32.totalorder 1, %s9
    %p117 = scmp.lt.s32.totalorder %s9, 3
    %p118 = pnand %p116, %p117
    %p119 = pneg %p118
    // Predicated region
    $region9: #{tpu_custom_call.1} parent=5 // pred_check
      _
    $region10: #{tpu_custom_call.1} parent=5 // pred_check_branch
      %121 = sbr.rel (%p118) target = $region12
    $region11: #{tpu_custom_call.1} parent=5 // pred_region
      %s122 = ssub.s32 %s9, 1
      // Predicated region
      $region13: #{tpu_custom_call.1} parent=11 // pred_check
        %p123 = pneg %p82
      $region14: #{tpu_custom_call.1} parent=11 // pred_check_branch
        %125 = sbr.rel (%p123) target = $region16
      $region15: #{tpu_custom_call.1} parent=11 // pred_region
        _
      $region16: #{tpu_custom_call.1} parent=11 // pred_fallthru
        _
    $region12: #{tpu_custom_call.1} parent=5 // pred_fallthru
      _
    %p126 = scmp.lt.s32.totalorder %s9, 2
    // Predicated region
    $region17: #{tpu_custom_call.1} parent=5 // pred_check
      %p127 = pneg %p126
    $region18: #{tpu_custom_call.1} parent=5 // pred_check_branch
      %129 = sbr.rel (%p127) target = $region20
    $region19: #{tpu_custom_call.1} parent=5 // pred_region
      // Predicated region
      $region21: #{tpu_custom_call.1} parent=19 // pred_check
        %p130 = pneg %p29
      $region22: #{tpu_custom_call.1} parent=19 // pred_check_branch
        %132 = sbr.rel (%p130) target = $region24
      $region23: #{tpu_custom_call.1} parent=19 // pred_region
        %s133 = smul.u32 2, %s9
        %p134 = scmp.lt.s32.totalorder %s133, 3
        %s135 = scalar_select %p134, %s133, 3
        %s136 = smul.addr %s135, 8
        %s137 = scalar_lea.vmem %s0, %s136
        %s138 = smul.u32 2, %s9
      $region24: #{tpu_custom_call.1} parent=19 // pred_fallthru
        _
      // Predicated region
      $region25: #{tpu_custom_call.1} parent=19 // pred_check
        %p139 = pneg %p55
      $region26: #{tpu_custom_call.1} parent=19 // pred_check_branch
        %141 = sbr.rel (%p139) target = $region28
      $region27: #{tpu_custom_call.1} parent=19 // pred_region
        %s142 = smul.u32 2, %s9
        %p143 = scmp.lt.s32.totalorder %s142, 3
        %s144 = scalar_select %p143, %s142, 3
        %s145 = smul.addr %s144, 8
        %s146 = scalar_lea.vmem %s1, %s145
        %s147 = smul.u32 2, %s9
      $region28: #{tpu_custom_call.1} parent=19 // pred_fallthru
        _
    $region20: #{tpu_custom_call.1} parent=5 // pred_fallthru
      _
    %p148 = scmp.le.s32.totalorder 1, %s9
    %p149 = scmp.lt.s32.totalorder %s9, 3
    %p150 = pnand %p148, %p149
    %p151 = pneg %p150
    // Predicated region
    $region29: #{tpu_custom_call.1} parent=5 // pred_check
      _
    $region30: #{tpu_custom_call.1} parent=5 // pred_check_branch
      %153 = sbr.rel (%p150) target = $region32
    $region31: #{tpu_custom_call.1} parent=5 // pred_region
      %s154 = ssub.s32 %s9, 1
      %s155 = smul.u32 2, %s14
      %p156 = scmp.lt.s32.totalorder %s155, 3
      %s157 = scalar_select %p156, %s155, 3
      %s158 = smul.addr %s157, 8
      %s159 = scalar_lea.vmem %s0, %s158
      %p160 = pneg %p35
      %p161 = pneg %p32
      %s162 = smul.u32 2, %s14
      %p163 = scmp.lt.s32.totalorder %s162, 3
      %s164 = scalar_select %p163, %s162, 3
      %s165 = smul.addr %s164, 8
      %s166 = scalar_lea.vmem %s1, %s165
      %p167 = pneg %p61
      %p168 = pneg %p58
      %p169 = pneg %p82
      %p170 = pneg %p79
      %p171 = pneg %p108
      %p172 = pneg %p105
      %s173 = smul.u32 2, %s14
      %p174 = scmp.lt.s32.totalorder %s173, 3
      %s175 = scalar_select %p174, %s173, 3
      %s176 = smul.addr %s175, 8
      %s177 = scalar_lea.vmem %s3, %s176
      %s178 = smul.u32 2, %s14
      %p179 = scmp.lt.s32.totalorder %s178, 3
      %s180 = scalar_select %p179, %s178, 3
      %s181 = smul.addr %s180, 8
      %s182 = scalar_lea.vmem %s0, %s181
      %s183 = smul.u32 2, %s14
      %s184 = smul.u32 2, %s14
      %p185 = scmp.lt.s32.totalorder %s184, 3
      %s186 = scalar_select %p185, %s184, 3
      %s187 = smul.addr %s186, 8
      %s188 = scalar_lea.vmem %s1, %s187
      %s189 = smul.u32 2, %s14
      %s190 = smul.u32 2, %s14
      %p191 = scmp.lt.s32.totalorder %s190, 3
      %s192 = scalar_select %p191, %s190, 3
      %s193 = smul.addr %s192, 8
      %s194 = scalar_lea.vmem %s3, %s193
      %s195 = smul.u32 2, %s14
      %v196 = vld [vmem:[%s182] sm:$0xff]
      %v197 = vld [vmem:[%s182 + $0x8] sm:$0xff]
      %v198 = vlaneseq
      %v199 = vand.u32 %v198, 127
      %v200 = vld [vmem:[%s188] sm:$0xff]
      %v201 = vld [vmem:[%s188 + $0x8] sm:$0xff]
      %202 = vset.pattern.permute.xlu0 0
      %203 = vperm.xlu0 %202, %v200
      %v204 = vpop.permute.xlu0 %203
      %205 = vset.pattern.permute.xlu0 0
      %206 = vperm.xlu0 %205, %v201
      %v207 = vpop.permute.xlu0 %206
      %vm208 = vcmp.eq.s32.totalorder %v199, %v204
      %vm209 = vcmp.eq.s32.totalorder %v199, %v207
      %v210 = vmul.f32 %v196, 30.0
      %v211 = vmul.f32 %v197, 30.0
      %v212 = vld [vmem:[%s2] sm:$0x1]
      %v214 = vlaneseq
      %v215 = vshrl.u32 %v214, 7
      %v216 = vsub.s32 0, %v215
      %v217 = vrot.slane %v212, %v216
      %v219 = vsel %vm208, %v217, 0.0
      %v220 = vsel %vm209, %v217, 0.0
      %v221 = vsub.f32 %v210, %v219
      %v222 = vsub.f32 %v211, %v220
      %vm223 = vcmask 130048
      %v224 = vsel %vm223, %v221, -inf
      %225 = vmax.xlane.f32.xlu0 %v224
      %v226 = vpop.xlane.xlu0 %225
      %v227 = vsel %vm223, %v222, -inf
      %228 = vmax.xlane.f32.xlu0 %v227
      %v229 = vpop.xlane.xlu0 %228
      %v230 = vsub.f32 %v221, %v226
      %v231 = vsub.f32 %v222, %v229
      %v232 = vmul.f32 %v230, 1.442695
      %v233 = vpow.pop %v232
      %v234 = vmul.f32 %v231, 1.442695
      %v235 = vpow.pop %v234
      %v236 = vsel %vm223, %v233, 0.0
      %237 = vadd.xlane.f32.xlu0 %v236
      %v238 = vpop.xlane.xlu0 %237
      %v239 = vsel %vm223, %v235, 0.0
      %240 = vadd.xlane.f32.xlu0 %v239
      %v241 = vpop.xlane.xlu0 %240
      %v242 = vsel %vm208, %v221, 0.0
      %v243 = vsel %vm209, %v222, 0.0
      %v244 = vsel %vm223, %v242, 0.0
      %245 = vadd.xlane.f32.xlu0 %v244
      %v246 = vpop.xlane.xlu0 %245
      %v247 = vsel %vm223, %v243, 0.0
      %248 = vadd.xlane.f32.xlu0 %v247
      %v249 = vpop.xlane.xlu0 %248
      %v250 = vlog2.pop %v238
      %v251 = vmul.f32 %v250, 0.6931472
      %v252 = vlog2.pop %v241
      %v253 = vmul.f32 %v252, 0.6931472
      %v254 = vadd.f32 %v226, %v251
      %v255 = vadd.f32 %v229, %v253
      %v256 = vsub.f32 %v254, %v246
      %v257 = vsub.f32 %v255, %v249
      %vm258 = vcmask 7168
      %259 = vst.msk [vmem:[%s194] sm:$0xff] %vm258, %v256
      %260 = vst.msk [vmem:[%s194 + $0x8] sm:$0xff] %vm258, %v257
      %s261 = smul.u32 2, %s14
      %p262 = scmp.lt.s32.totalorder %s261, 3
      %s263 = scalar_select %p262, %s261, 3
      %s264 = smul.addr %s263, 8
      %s265 = scalar_lea.vmem %s3, %s264
      // Predicated region
      $region33: #{tpu_custom_call.1} parent=31 // pred_check
        %p266 = pneg %p105
      $region34: #{tpu_custom_call.1} parent=31 // pred_check_branch
        %268 = sbr.rel (%p266) target = $region36
      $region35: #{tpu_custom_call.1} parent=31 // pred_region
        %s269 = smul.u32 2, %s14
      $region36: #{tpu_custom_call.1} parent=31 // pred_fallthru
        _
    $region32: #{tpu_custom_call.1} parent=5 // pred_fallthru
      _
    %p270 = scmp.le.s32.totalorder 2, %s9
    // Predicated region
    $region37: #{tpu_custom_call.1} parent=5 // pred_check
      %p271 = pneg %p270
    $region38: #{tpu_custom_call.1} parent=5 // pred_check_branch
      %273 = sbr.rel (%p271) target = $region40
    $region39: #{tpu_custom_call.1} parent=5 // pred_region
      %s274 = ssub.s32 %s9, 2
      // Predicated region
      $region41: #{tpu_custom_call.1} parent=39 // pred_check
        %p275 = pneg %p111
      $region42: #{tpu_custom_call.1} parent=39 // pred_check_branch
        %277 = sbr.rel (%p275) target = $region44
      $region43: #{tpu_custom_call.1} parent=39 // pred_region
        %s278 = smul.u32 2, %s15
        %p279 = scmp.lt.s32.totalorder %s278, 3
        %s280 = scalar_select %p279, %s278, 3
        %s281 = smul.addr %s280, 8
        %s282 = scalar_lea.vmem %s3, %s281
      $region44: #{tpu_custom_call.1} parent=39 // pred_fallthru
        _
    $region40: #{tpu_custom_call.1} parent=5 // pred_fallthru
      _
  $region6: #{tpu_custom_call.1} parent=0 // loop_footer
    %s13 = sadd.s32 1, %s9
  $region7: #{tpu_custom_call.1} parent=0 // loop_footer_branch
    %8 = sbr.rel target = $region3
  $region8: #{tpu_custom_call.1} parent=0 // loop_exit
    _

</llo_original>
